<compile_context>
chip_gen: v7x
topology: tpu7x:2x2x1
jax: 0.10.0
libtpu: 0.0.40
codegen_flags: <defaults>
</compile_context>

<pallas_src>
import jax
import jax.numpy as jnp
from jax import lax
from jax.experimental import pallas as pl
from jax.experimental.pallas import tpu as pltpu


_MAX_SINGLE_ROW = 65536  # cap for the zero-copy (1, N) fallback layout


def _cdiv(a, b):
    return -(-a // b)


def _tpu_profile():
    """Returns (per-input block bytes, tensorcores/chip, vmem_limit_bytes|None)."""
    kind = ""
    try:
        dev = jax.devices()[0]
        if dev.platform == "tpu":
            kind = dev.device_kind.lower()
    except Exception:
        pass
    if "v7" in kind or "tpu7" in kind or "tpu 7" in kind:
        # ~3.2 TB/s HBM, 2 TCs, 64 MiB VMEM: move >=8 MiB of input per grid step.
        return 4 << 20, 2, 48 << 20
    if "v5e" in kind or "v5 lite" in kind or "v5lite" in kind:
        # ~0.8 TB/s HBM, 16 MiB default scoped VMEM: 1 MiB/input is ~roofline already.
        return 1 << 20, 1, None
    # v6e / default.
    return 2 << 20, 1, None


def _choose_layout(n):
    """Pick a copy-free (rows, cols) 2-D view of the flat element stream."""
    for c in (512, 256, 128):
        if n % c == 0:
            return n // c, c, 0
    if n <= _MAX_SINGLE_ROW:
        return 1, n, 0  # single full-extent (1, N) block: still no copy
    # TODO(synk): rare fallback (huge N not divisible by 128) still pays one
    # jnp.pad pass; a manual-DMA ragged tail would remove it.
    pad = (-n) % 128
    return (n + pad) // 128, 128, pad


def _make_reduction_kernel(tm, steps, rows, needs_mask):
    def kernel(pred_ref, lab_ref, out_ref, acc_ref):
        s = pl.program_id(1)

        @pl.when(s == 0)
        def _init():
            acc_ref[...] = jnp.zeros_like(acc_ref)

        p = pred_ref[...].astype(jnp.float32)
        l = lab_ref[...].astype(jnp.float32)
        # sigmoid(-p*(2l-1)) - 0.5 == 0.5 * tanh(p * (0.5 - l))
        arg = p * (0.5 - l)
        if needs_mask:
            # Logical (unclamped) tile id; rows past `rows` (partial last tile
            # or clamped dummy tiles) contribute exactly 0.
            tile = pl.program_id(0) * steps + s
            row_ids = tile * tm + lax.broadcasted_iota(jnp.int32, arg.shape, 0)
            arg = jnp.where(row_ids < rows, arg, 0.0)
        acc_ref[...] += 0.5 * jnp.tanh(arg)

        @pl.when(s == steps - 1)
        def _finalize():
            # Fold the (tm, cols) accumulator to a tiny lane-dense (1, cols)
            # block before the HBM writeback.
            out_ref[...] = jnp.sum(acc_ref[...], axis=0, keepdims=True)

    return kernel


def _elementwise_kernel(pred_ref, lab_ref, out_ref):
    p = pred_ref[...].astype(jnp.float32)
    l = lab_ref[...].astype(jnp.float32)
    # sigmoid(-p*(2l-1)) == 0.5 * tanh(p * (0.5 - l)) + 0.5
    out_ref[...] = (0.5 * jnp.tanh(p * (0.5 - l)) + 0.5).astype(out_ref.dtype)


def sigmoid_loss(predictions, labels, reduction=True, *, tile_rows=None,
                 two_core_split=None):
    """Pallas TPU implementation of SigmoidLoss.forward."""
    predictions = jnp.asarray(predictions)
    labels = jnp.asarray(labels)
    if labels.shape != predictions.shape:
        labels = jnp.broadcast_to(labels, predictions.shape)

    orig_shape = predictions.shape
    total_n = 1
    for d in orig_shape:
        total_n *= int(d)
    assert total_n > 0, "empty input"

    # Predictions must be a <=32-bit float (compute upcasts to f32 in-kernel).
    if (not jnp.issubdtype(predictions.dtype, jnp.floating)
            or predictions.dtype.itemsize > 4):
        predictions = predictions.astype(jnp.float32)
    out_dtype = predictions.dtype

    # Labels stay in their native (possibly narrow) dtype; only remap dtypes
    # the TPU backend dislikes (bool, 64-bit).  *2-1 happens inside the kernel,
    # so soft labels keep full precision as well.
    if labels.dtype == jnp.bool_:
        labels = labels.astype(jnp.int8)
    elif labels.dtype.itemsize > 4:
        labels = labels.astype(
            jnp.float32 if jnp.issubdtype(labels.dtype, jnp.floating)
            else jnp.int32)

    block_bytes, n_cores, vmem_limit = _tpu_profile()

    rows, cols, pad = _choose_layout(total_n)
    pred_flat = predictions.reshape(-1)
    lab_flat = labels.reshape(-1)
    if pad:  # rare; see _choose_layout
        pred_flat = jnp.pad(pred_flat, (0, pad))
        lab_flat = jnp.pad(lab_flat, (0, pad))
    pred2 = pred_flat.reshape(rows, cols)
    lab2 = lab_flat.reshape(rows, cols)

    # Row-tile size, sized in f32 bytes (compute/accumulator are f32) and a
    # multiple of 32 rows so f32/bf16/int8 sublane tilings are all satisfied.
    if tile_rows is not None:
        tm_target = max(32, (int(tile_rows) // 32) * 32)
    else:
        tm_target = max(32, (block_bytes // (cols * 4)) // 32 * 32)
    if rows <= tm_target:
        tm, n_tiles = rows, 1            # single full-extent block
    else:
        tm, n_tiles = tm_target, _cdiv(rows, tm_target)

    n_bytes_in = rows * cols * (pred2.dtype.itemsize + lab2.dtype.itemsize)

    if reduction:
        if two_core_split is None:
            two_core_split = n_cores >= 2
        n_par = 2 if (two_core_split and n_tiles >= 2) else 1
        steps = _cdiv(n_tiles, n_par)
        needs_mask = (n_tiles * tm != rows) or (n_par * steps != n_tiles)

        if n_par * steps == n_tiles:
            in_map = lambda p, s: (p * steps + s, 0)
        else:
            # Clamp the DMA of trailing dummy tiles; they are fully masked.
            in_map = lambda p, s: (jnp.minimum(p * steps + s, n_tiles - 1), 0)
        in_spec = pl.BlockSpec((tm, cols), in_map)

        partials = pl.pallas_call(
            _make_reduction_kernel(tm, steps, rows, needs_mask),
            out_shape=jax.ShapeDtypeStruct((n_par, 1, cols), jnp.float32),
            grid_spec=pltpu.PrefetchScalarGridSpec(
                num_scalar_prefetch=0,
                grid=(n_par, steps),
                in_specs=[in_spec, in_spec],
                out_specs=pl.BlockSpec((None, 1, cols), lambda p, s: (p, 0, 0)),
                scratch_shapes=[pltpu.VMEM((tm, cols), jnp.float32)],
            ),
            compiler_params=pltpu.CompilerParams(
                dimension_semantics=("parallel", "arbitrary"),
                vmem_limit_bytes=vmem_limit),
            cost_estimate=pl.CostEstimate(
                flops=5 * total_n,
                transcendentals=total_n,
                bytes_accessed=n_bytes_in + n_par * cols * 4),
        )(pred2, lab2)
        # Tiny (<= 2*cols floats) cross-lane reduction, done once in JAX.
        # Masked / zero-padded elements contributed exactly 0.
        mean = jnp.sum(partials) / float(total_n) + 0.5
        return mean.astype(out_dtype)

    # Elementwise (no reduction) path.  Partial last tile relies on Pallas
    # dropping out-of-bounds writes; reads of garbage rows are harmless.
    io_map = lambda i: (i, 0)
    out2 = pl.pallas_call(
        _elementwise_kernel,
        out_shape=jax.ShapeDtypeStruct((rows, cols), out_dtype),
        grid_spec=pltpu.PrefetchScalarGridSpec(
            num_scalar_prefetch=0,
            grid=(n_tiles,),
            in_specs=[pl.BlockSpec((tm, cols), io_map),
                      pl.BlockSpec((tm, cols), io_map)],
            out_specs=pl.BlockSpec((tm, cols), io_map),
        ),
        compiler_params=pltpu.CompilerParams(
            dimension_semantics=("parallel",),
            vmem_limit_bytes=vmem_limit),
        cost_estimate=pl.CostEstimate(
            flops=5 * total_n,
            transcendentals=total_n,
            bytes_accessed=n_bytes_in + rows * cols * out_dtype.itemsize),
    )(pred2, lab2)
    if pad:
        return out2.reshape(-1)[:total_n].reshape(orig_shape)
    return out2.reshape(orig_shape)


if __name__ == "__main__":
    key = jax.random.PRNGKey(0)
    k = jax.random.split(key, 8)

    def ref_loss(p, l, reduction):
        y = l.astype(jnp.float32) * 2.0 - 1.0
        loss = jax.nn.sigmoid(-p.astype(jnp.float32) * y)
        return loss.mean() if reduction else loss

    # 1) Small, tile-friendly shape (element count divisible by 512).
    shape1 = (2, 4, 16, 16)
    p1 = jax.random.normal(k[0], shape1, dtype=jnp.float32)
    l1 = (jax.random.uniform(k[1], shape1) > 0.5).astype(jnp.float32)
    m1 = jax.block_until_ready(sigmoid_loss(p1, l1, reduction=True))
    e1 = jax.block_until_ready(sigmoid_loss(p1, l1, reduction=False))
    assert jnp.allclose(m1, ref_loss(p1, l1, True), atol=1e-5, rtol=1e-5)
    assert jnp.allclose(e1, ref_loss(p1, l1, False), atol=1e-5, rtol=1e-5)

    # 2) Awkward size -> zero-copy single (1, N) block path.
    shape2 = (3, 5, 7)
    p2 = jax.random.normal(k[2], shape2, dtype=jnp.float32)
    l2 = (jax.random.uniform(k[3], shape2) > 0.5).astype(jnp.float32)
    m2 = jax.block_until_ready(sigmoid_loss(p2, l2, reduction=True))
    e2 = jax.block_until_ready(sigmoid_loss(p2, l2, reduction=False))
    assert jnp.allclose(m2, ref_loss(p2, l2, True), atol=1e-5, rtol=1e-5)
    assert jnp.allclose(e2, ref_loss(p2, l2, False), atol=1e-5, rtol=1e-5)

    # 3) Multi-tile path with ragged last tile + forced 2-way split (small
    #    tiles forced so the masked/clamped accumulation path is exercised).
    shape3 = (20, 16, 128)  # 40960 elements -> (80, 512) layout, tiles of 32 rows
    p3 = jax.random.normal(k[4], shape3, dtype=jnp.float32)
    l3 = (jax.random.uniform(k[5], shape3) > 0.5).astype(jnp.float32)
    m3 = jax.block_until_ready(
        sigmoid_loss(p3, l3, reduction=True, tile_rows=32, two_core_split=True))
    e3 = jax.block_until_ready(
        sigmoid_loss(p3, l3, reduction=False, tile_rows=32))
    assert jnp.allclose(m3, ref_loss(p3, l3, True), atol=1e-5, rtol=1e-5)
    assert jnp.allclose(e3, ref_loss(p3, l3, False), atol=1e-5, rtol=1e-5)

    # 4) Native narrow dtypes: bf16 predictions + int8 {0,1} labels.
    shape4 = (4, 256)
    p4 = jax.random.normal(k[6], shape4, dtype=jnp.float32).astype(jnp.bfloat16)
    l4 = (jax.random.uniform(k[7], shape4) > 0.5).astype(jnp.int8)
    m4 = jax.block_until_ready(sigmoid_loss(p4, l4, reduction=True))
    e4 = jax.block_until_ready(sigmoid_loss(p4, l4, reduction=False))
    assert jnp.allclose(m4.astype(jnp.float32), ref_loss(p4, l4, True), atol=2e-2)
    assert jnp.allclose(e4.astype(jnp.float32), ref_loss(p4, l4, False), atol=2e-2)

    print("KERNEL_OK")
</pallas_src>

<mosaic_0001>
module attributes {stable_mosaic.version = 11 : i64} {
  func.func @kernel(%arg0: i32, %arg1: i32, %arg2: memref<4x512xf32, #tpu.memory_space<vmem>>, %arg3: memref<4x512xf32, #tpu.memory_space<vmem>>, %arg4: memref<1x1x512xf32, #tpu.memory_space<vmem>>, %arg5: memref<4x512xf32, #tpu.memory_space<vmem>>) attributes {dimension_semantics = [#tpu.dimension_semantics<parallel>, #tpu.dimension_semantics<arbitrary>], iteration_bounds = array<i64: 1, 1>, scalar_prefetch = 0 : i64, scratch_operands = 1 : i64, tpu.core_type = #tpu.core_type<tc>, window_params = [{transform_indices = @transform_0, window_bounds = array<i64: 4, 512>}, {transform_indices = @transform_1, window_bounds = array<i64: 4, 512>}, {transform_indices = @transform_2, window_bounds = array<i64: 1, 1, 512>}]} {
    %c0_i32 = arith.constant 0 : i32
    %0 = arith.cmpi eq, %arg1, %c0_i32 : i32
    %1 = arith.extui %0 : i1 to i32
    %c0_i32_0 = arith.constant 0 : i32
    %2 = arith.cmpi ne, %1, %c0_i32_0 : i32
    scf.if %2 {
      %cst_11 = arith.constant 0.000000e+00 : f32
      %17 = vector.broadcast %cst_11 : f32 to vector<4x512xf32>
      %c0_12 = arith.constant 0 : index
      %c0_13 = arith.constant 0 : index
      %18 = vector.load %arg5[%c0_12, %c0_13] : memref<4x512xf32, #tpu.memory_space<vmem>>, vector<4x512xf32>
      tpu.vector_store %arg5[%c0_12, %c0_13], %17 {strides = array<i32>} : memref<4x512xf32, #tpu.memory_space<vmem>>, vector<4x512xf32>,
    } else {
    }
    %c0 = arith.constant 0 : index
    %c0_1 = arith.constant 0 : index
    %3 = vector.load %arg2[%c0, %c0_1] : memref<4x512xf32, #tpu.memory_space<vmem>>, vector<4x512xf32>
    %c0_2 = arith.constant 0 : index
    %c0_3 = arith.constant 0 : index
    %4 = vector.load %arg3[%c0_2, %c0_3] : memref<4x512xf32, #tpu.memory_space<vmem>>, vector<4x512xf32>
    %cst = arith.constant 5.000000e-01 : f32
    %5 = vector.broadcast %cst : f32 to vector<4x512xf32>
    %6 = arith.subf %5, %4 : vector<4x512xf32>
    %7 = arith.mulf %3, %6 : vector<4x512xf32>
    %c0_4 = arith.constant 0 : index
    %c0_5 = arith.constant 0 : index
    %8 = vector.load %arg5[%c0_4, %c0_5] : memref<4x512xf32, #tpu.memory_space<vmem>>, vector<4x512xf32>
    %9 = math.tanh %7 : vector<4x512xf32>
    %cst_6 = arith.constant 5.000000e-01 : f32
    %10 = vector.broadcast %cst_6 : f32 to vector<4x512xf32>
    %11 = arith.mulf %10, %9 : vector<4x512xf32>
    %12 = arith.addf %8, %11 : vector<4x512xf32>
    %c0_7 = arith.constant 0 : index
    %c0_8 = arith.constant 0 : index
    %13 = vector.load %arg5[%c0_7, %c0_8] : memref<4x512xf32, #tpu.memory_space<vmem>>, vector<4x512xf32>
    tpu.vector_store %arg5[%c0_7, %c0_8], %12 {strides = array<i32>} : memref<4x512xf32, #tpu.memory_space<vmem>>, vector<4x512xf32>,
    %c0_i32_9 = arith.constant 0 : i32
    %14 = arith.cmpi eq, %arg1, %c0_i32_9 : i32
    %15 = arith.extui %14 : i1 to i32
    %c0_i32_10 = arith.constant 0 : i32
    %16 = arith.cmpi ne, %15, %c0_i32_10 : i32
    scf.if %16 {
      %c0_11 = arith.constant 0 : index
      %c0_12 = arith.constant 0 : index
      %17 = vector.load %arg5[%c0_11, %c0_12] : memref<4x512xf32, #tpu.memory_space<vmem>>, vector<4x512xf32>
      %cst_13 = arith.constant dense<0.000000e+00> : vector<512xf32>
      %18 = vector.multi_reduction <add>, %17, %cst_13 [0] : vector<4x512xf32> to vector<512xf32>
      %19 = vector.shape_cast %18 : vector<512xf32> to vector<1x512xf32>
      %c0_14 = arith.constant 0 : index
      %c0_15 = arith.constant 0 : index
      %c0_16 = arith.constant 0 : index
      %20 = vector.load %arg4[%c0_14, %c0_15, %c0_16] : memref<1x1x512xf32, #tpu.memory_space<vmem>>, vector<1x1x512xf32>
      %21 = vector.shape_cast %20 : vector<1x1x512xf32> to vector<1x512xf32>
      %22 = vector.shape_cast %19 : vector<1x512xf32> to vector<1x1x512xf32>
      tpu.vector_store %arg4[%c0_14, %c0_15, %c0_16], %22 {strides = array<i32>} : memref<1x1x512xf32, #tpu.memory_space<vmem>>, vector<1x1x512xf32>,
    } else {
    }
    return
  }
  func.func @transform_0(%arg0: i32, %arg1: i32) -> (i32, i32) {
    %c1_i32 = arith.constant 1 : i32
    %0 = arith.muli %arg0, %c1_i32 : i32
    %1 = arith.addi %0, %arg1 : i32
    %c0_i32 = arith.constant 0 : i32
    %c0_i32_0 = arith.constant 0 : i32
    return %1, %c0_i32 : i32, i32
  }
  func.func @transform_1(%arg0: i32, %arg1: i32) -> (i32, i32) {
    %c1_i32 = arith.constant 1 : i32
    %0 = arith.muli %arg0, %c1_i32 : i32
    %1 = arith.addi %0, %arg1 : i32
    %c0_i32 = arith.constant 0 : i32
    %c0_i32_0 = arith.constant 0 : i32
    return %1, %c0_i32 : i32, i32
  }
  func.func @transform_2(%arg0: i32, %arg1: i32) -> (i32, i32, i32) {
    %c0_i32 = arith.constant 0 : i32
    %c0_i32_0 = arith.constant 0 : i32
    %c0_i32_1 = arith.constant 0 : i32
    return %arg0, %c0_i32, %c0_i32_0 : i32, i32, i32
  }
}

</mosaic_0001>

<llo_original>
// kernel: tpu_custom_call.1
$region0: #{tpu_custom_call.1}
  #allocation0 [shape = 'u32[]', space=smem, size = 0x4, offset = 0x4, fixed_abs, tag = 'smem constant byte address 0x4 - core index']
  #allocation1 [shape = 'u32[144,128]{1,0:T(1,128)}', space=vmem, size = 0x12000, scoped, tag = 'internal scratch']
  #allocation2 [shape = 'f32[4,512]{1,0:T(4,128)}', space=vmem, size = 0x2000, scoped, tag = 'scratch operand']
  %s0 = inlined_call_operand.hbm [shape: f32[4,512], index: 0, kind: input, shape index: {}]
  %s1 = inlined_call_operand.hbm [shape: f32[4,512], index: 1, kind: input, shape index: {}]
  %s2 = inlined_call_operand.hbm [shape: f32[1,1,512], index: 2, kind: output, shape index: {}]
  %s3 = sld [smem:[#allocation0]]
  $region34: #{tpu_custom_call.1} parent=0
    _
  %s5 = ssub.s32 1, %s3
  %s6 = scalar_select 0, %s5, %s3
  $region1: #{tpu_custom_call.1} parent=0
    #allocation3 [shape = 'u8[8192]{0}', space=vmem, size = 0x2000, scoped, tag = 'input window, operand 0, single buffered']
    #allocation4 [shape = 's32[1]{0}', space=sflag, size = 0x4, scoped, tag = 'scoped memory for tpu_custom_call.1']
    #allocation5 [shape = 's32[1]{0}', space=sflag, size = 0x4, scoped, tag = 'scoped memory for tpu_custom_call.1']
    #allocation6 [shape = 'u8[8192]{0}', space=vmem, size = 0x2000, scoped, tag = 'input window, operand 1, single buffered']
    #allocation7 [shape = 's32[1]{0}', space=sflag, size = 0x4, scoped, tag = 'scoped memory for tpu_custom_call.1']
    #allocation8 [shape = 'u8[2048]{0}', space=vmem, size = 0x800, scoped, tag = 'output window, operand 0, single buffered']
    %7 = vsyncpa [#allocation4], 0
    %8 = vsyncpa [#allocation7], 0
    %9 = vsyncpa [#allocation5], 0
    // Predicated region
    $region2: #{tpu_custom_call.1} parent=1 // pred_check
      _
    $region3: #{tpu_custom_call.1} parent=1 // pred_check_branch
      %11 = sbr.rel (0) target = $region5
    $region4: #{tpu_custom_call.1} parent=1 // pred_region
      %s12 = sadd.s32 0, 0
      %s14 = ssub.s32 256, 256
      %15 = vsyncadd [#allocation4], %s14
      %s16 = smul.addr %s12, 4
      %s17 = smul.addr %s16, 64
      %s18 = scalar_lea.hbm %s0, %s17
      %s20 = sshll.u32 [#allocation3], 4
      %s21 = int_to_ptr.vmem [resolvable:$true] %s20
      %23 = dma.hbm_to_vmem [thread:$0]  %s18, 256, %s21, [#allocation4]
    $region5: #{tpu_custom_call.1} parent=1 // pred_fallthru
      _
    // Predicated region
    $region6: #{tpu_custom_call.1} parent=1 // pred_check
      _
    $region7: #{tpu_custom_call.1} parent=1 // pred_check_branch
      %25 = sbr.rel (0) target = $region9
    $region8: #{tpu_custom_call.1} parent=1 // pred_region
      %s26 = sadd.s32 0, 0
      %s28 = ssub.s32 256, 256
      %29 = vsyncadd [#allocation7], %s28
      %s30 = smul.addr %s26, 4
      %s31 = smul.addr %s30, 64
      %s32 = scalar_lea.hbm %s1, %s31
      %s34 = sshll.u32 [#allocation6], 4
      %s35 = int_to_ptr.vmem [resolvable:$true] %s34
      %37 = dma.hbm_to_vmem [thread:$0]  %s32, 256, %s35, [#allocation7]
    $region9: #{tpu_custom_call.1} parent=1 // pred_fallthru
      _
    // Predicated region
    $region10: #{tpu_custom_call.1} parent=1 // pred_check
      _
    $region11: #{tpu_custom_call.1} parent=1 // pred_check_branch
      %39 = sbr.rel (0) target = $region13
    $region12: #{tpu_custom_call.1} parent=1 // pred_region
      %40 = dma.done [#allocation4], 256
    $region13: #{tpu_custom_call.1} parent=1 // pred_fallthru
      _
    // Predicated region
    $region14: #{tpu_custom_call.1} parent=1 // pred_check
      _
    $region15: #{tpu_custom_call.1} parent=1 // pred_check_branch
      %42 = sbr.rel (0) target = $region17
    $region16: #{tpu_custom_call.1} parent=1 // pred_region
      %43 = dma.done [#allocation7], 256
    $region17: #{tpu_custom_call.1} parent=1 // pred_fallthru
      _
    %s44 = sadd.s32 0, 0
    %s45 = sadd.s32 0, 0
    %p46 = scmp.eq.s32.totalorder 0, 0
    // Predicated region
    $region18: #{tpu_custom_call.1} parent=1 // pred_check
      %p47 = pneg %p46
    $region19: #{tpu_custom_call.1} parent=1 // pred_check_branch
      %49 = sbr.rel (%p47) target = $region21
    $region20: #{tpu_custom_call.1} parent=1 // pred_region
      %50 = vst [vmem:[#allocation2] sm:$0xff] 0.0
      %51 = vst [vmem:[#allocation2 + $0x8] sm:$0xff] 0.0
    $region21: #{tpu_custom_call.1} parent=1 // pred_fallthru
      _
    %v52 = vld [vmem:[#allocation3] sm:$0xff]
    %v53 = vld [vmem:[#allocation3 + $0x8] sm:$0xff]
    %v54 = vld [vmem:[#allocation6] sm:$0xff]
    %v55 = vld [vmem:[#allocation6 + $0x8] sm:$0xff]
    %v56 = vsub.f32 0.5, %v54
    %v57 = vsub.f32 0.5, %v55
    %v58 = vmul.f32 %v52, %v56
    %v59 = vmul.f32 %v53, %v57
    %v60 = vld [vmem:[#allocation2] sm:$0xff]
    %v61 = vld [vmem:[#allocation2 + $0x8] sm:$0xff]
    %v62 = vtanh.pop %v58
    %v63 = vtanh.pop %v59
    %v64 = vmul.f32 %v62, 0.5
    %v65 = vmul.f32 %v63, 0.5
    %v66 = vadd.f32 %v60, %v64
    %v67 = vadd.f32 %v61, %v65
    %68 = vst [vmem:[#allocation2] sm:$0xff] %v66
    %69 = vst [vmem:[#allocation2 + $0x8] sm:$0xff] %v67
    // Predicated region
    $region22: #{tpu_custom_call.1} parent=1 // pred_check
      %p70 = pneg %p46
    $region23: #{tpu_custom_call.1} parent=1 // pred_check_branch
      %72 = sbr.rel (%p70) target = $region25
    $region24: #{tpu_custom_call.1} parent=1 // pred_region
      %v73 = vld [vmem:[#allocation2] sm:$0xff]
      %v74 = vld [vmem:[#allocation2 + $0x8] sm:$0xff]
      %v77 = vcombine.high %v73, %v73
      %v78 = vcombine.high %v74, %v74
      %vm81 = vcmask 1043456
      %v82 = vsel %vm81, %v73, 0.0
      %v83 = vrot.slane %v82, 4
      %v84 = vadd.f32 %v82, %v83
      %v85 = vrot.slane %v84, 2
      %v86 = vadd.f32 %v84, %v85
      %v87 = vrot.slane %v86, 1
      %v88 = vadd.f32 %v86, %v87
      %v89 = vsel %vm81, %v77, 0.0
      %v90 = vrot.slane %v89, 4
      %v91 = vadd.f32 %v89, %v90
      %v92 = vrot.slane %v91, 2
      %v93 = vadd.f32 %v91, %v92
      %v94 = vrot.slane %v93, 1
      %v95 = vadd.f32 %v93, %v94
      %v96 = vsel %vm81, %v74, 0.0
      %v97 = vrot.slane %v96, 4
      %v98 = vadd.f32 %v96, %v97
      %v99 = vrot.slane %v98, 2
      %v100 = vadd.f32 %v98, %v99
      %v101 = vrot.slane %v100, 1
      %v102 = vadd.f32 %v100, %v101
      %v103 = vsel %vm81, %v78, 0.0
      %v104 = vrot.slane %v103, 4
      %v105 = vadd.f32 %v103, %v104
      %v106 = vrot.slane %v105, 2
      %v107 = vadd.f32 %v105, %v106
      %v108 = vrot.slane %v107, 1
      %v109 = vadd.f32 %v107, %v108
      %v114 = vcombine.low %v88, %v95
      %v115 = vcombine.low %v102, %v109
      %v117 = vunpack.c.l.s4 1966171168
      %v118 = vunpack.c.0.s8 %v117
      %v119 = vlaneseq
      %v120 = vshrl.u32 %v119, 7
      %v121 = vsub.s32 %v118, %v120
      %v122 = vrot.slane %v114, %v121
      %v124 = vunpack.c.l.s4 1966171168
      %v125 = vunpack.c.0.s8 %v124
      %v126 = vlaneseq
      %v127 = vshrl.u32 %v126, 7
      %v128 = vsub.s32 %v125, %v127
      %v129 = vrot.slane %v115, %v128
      %v130 = vcombine.low %v122, %v129
      %v132 = vunpack.c.l.s4 1966171168
      %v133 = vunpack.c.0.s8 %v132
      %v134 = vlaneseq
      %v135 = vshrl.u32 %v134, 7
      %v136 = vsub.s32 %v133, %v135
      %v137 = vrot.slane %v130, %v136
      %v139 = vlaneseq
      %vm140 = vcmp.ge.s32.totalorder %v139, 0
      %vm141 = vcmp.lt.s32.totalorder %v139, 512
      %vm142 = vmand %vm140, %vm141
      %143 = vst.msk [vmem:[#allocation8] sm:$0xf] %vm142, %v137
    $region25: #{tpu_custom_call.1} parent=1 // pred_fallthru
      _
    // Predicated region
    $region26: #{tpu_custom_call.1} parent=1 // pred_check
      _
    $region27: #{tpu_custom_call.1} parent=1 // pred_check_branch
      %145 = sbr.rel (0) target = $region29
    $region28: #{tpu_custom_call.1} parent=1 // pred_region
      %s147 = ssub.s32 64, 64
      %148 = vsyncadd [#allocation5], %s147
      %s150 = sshll.u32 [#allocation8], 4
      %s151 = int_to_ptr.vmem [resolvable:$true] %s150
      %153 = dma.vmem_to_hbm [thread:$0]  %s151, 64, %s2, [#allocation5]
    $region29: #{tpu_custom_call.1} parent=1 // pred_fallthru
      _
    // Predicated region
    $region30: #{tpu_custom_call.1} parent=1 // pred_check
      _
    $region31: #{tpu_custom_call.1} parent=1 // pred_check_branch
      %155 = sbr.rel (0) target = $region33
    $region32: #{tpu_custom_call.1} parent=1 // pred_region
      %156 = dma.done [#allocation5], 64
    $region33: #{tpu_custom_call.1} parent=1 // pred_fallthru
      _
    %157 = vsyncpa [#allocation4], 1
    %158 = vsyncpa [#allocation7], 1
    %159 = vsyncpa [#allocation5], 1

</llo_original>
